<compile_context>
chip_gen: v7x
topology: tpu7x:2x2x1
jax: 0.10.0
libtpu: 0.0.40
codegen_flags: <defaults>
</compile_context>

<pallas_src>
import jax
import jax.numpy as jnp
from jax.experimental import pallas as pl
from jax.experimental.pallas import tpu as pltpu


def _convt1x1_kernel(x_ref, w_ref, b_ref, o_ref):
    # x_ref: VMEM (N, C_in, HW)  -- whole input, spatial on lanes (dense)
    # w_ref: VMEM (C_in, 1)      -- lane-broadcast weight column
    # b_ref: SMEM (1,)           -- scalar bias
    # o_ref: VMEM (N, HW)        -- single lane-dense output slab
    n = x_ref.shape[0]
    w_col = w_ref[...].astype(jnp.float32)          # (C_in, 1)
    bias = b_ref[0]

    rows = []
    for i in range(n):  # N is tiny (2): static unroll
        # Full-vreg VALU multiply over the whole (C_in, HW) tile ...
        prod = x_ref[i].astype(jnp.float32) * w_col
        # ... then channel (sublane) reduction on the XLU.
        rows.append(jnp.sum(prod, axis=0, keepdims=True))   # (1, HW)

    out = jnp.concatenate(rows, axis=0) + bias               # (N, HW)
    o_ref[...] = out.astype(o_ref.dtype)                     # one dense store


def conv_transpose_1x1(x_nchw, weight, bias):
    """x_nchw: (N, C_in, H, W); weight: (C_in, C_out=1, 1, 1); bias: (C_out,)."""
    n, c_in, h, w = x_nchw.shape
    c_out = weight.shape[1]
    assert c_out == 1, "kernel written for C_out == 1 (ConvTranspose2d(12, 1, 1))"
    hw = h * w

    # No transposes: NCHW is already (batch, channel-on-sublane, spatial-on-lane).
    x3 = x_nchw.reshape(n, c_in, hw)
    w_col = weight.reshape(c_in, c_out).astype(jnp.float32)   # (C_in, 1)
    b1d = bias.reshape(c_out).astype(jnp.float32)

    out2 = pl.pallas_call(
        _convt1x1_kernel,
        out_shape=jax.ShapeDtypeStruct((n, hw), x_nchw.dtype),
        in_specs=[
            # Whole arrays, single invocation, single DMA each.
            pl.BlockSpec(memory_space=pltpu.MemorySpace.VMEM),
            pl.BlockSpec(memory_space=pltpu.MemorySpace.VMEM),
            pl.BlockSpec(memory_space=pltpu.MemorySpace.SMEM),
        ],
        out_specs=pl.BlockSpec(memory_space=pltpu.MemorySpace.VMEM),
    )(x3, w_col, b1d)

    # Pure reshape back to NCHW (C_out == 1, so no transpose needed).
    return out2.reshape(n, c_out, h, w)


def reference(x_nchw, weight, bias):
    # Pure-JAX reference of the same 1x1 transposed conv.
    w2d = weight.reshape(weight.shape[0], weight.shape[1])
    out = jnp.einsum("nchw,co->nohw", x_nchw, w2d) + bias.reshape(1, -1, 1, 1)
    return out


if __name__ == "__main__":
    key = jax.random.PRNGKey(0)
    k_x, k_w, k_b = jax.random.split(key, 3)

    # Small shapes consistent with the module: C_in must be 12, C_out = 1.
    n, c_in, h, w = 2, 12, 16, 16
    c_out = 1

    x = jax.random.normal(k_x, (n, c_in, h, w), dtype=jnp.float32)
    # Deterministic parameter init (shapes from ConvTranspose2d(12, 1, 1)).
    weight = jax.random.normal(k_w, (c_in, c_out, 1, 1), dtype=jnp.float32) * 0.1
    bias = jax.random.normal(k_b, (c_out,), dtype=jnp.float32) * 0.1

    out = conv_transpose_1x1(x, weight, bias)
    jax.block_until_ready(out)

    ref = reference(x, weight, bias)
    assert out.shape == (n, c_out, h, w), out.shape
    assert jnp.allclose(out, ref, atol=1e-5, rtol=1e-5), "mismatch vs reference"

    print("KERNEL_OK")
</pallas_src>

<mosaic_0001>
module attributes {stable_mosaic.version = 11 : i64} {
  func.func @_convt1x1_kernel(%arg0: memref<2x12x256xf32, #tpu.memory_space<vmem>>, %arg1: memref<12x1xf32, #tpu.memory_space<vmem>>, %arg2: memref<1xf32, #tpu.memory_space<smem>>, %arg3: memref<2x256xf32, #tpu.memory_space<vmem>>) attributes {dimension_semantics = [], scalar_prefetch = 0 : i64, scratch_operands = 0 : i64, tpu.core_type = #tpu.core_type<tc>} {
    %c0 = arith.constant 0 : index
    %c0_0 = arith.constant 0 : index
    %0 = vector.load %arg1[%c0, %c0_0] : memref<12x1xf32, #tpu.memory_space<vmem>>, vector<12x1xf32>
    %c0_1 = arith.constant 0 : index
    %1 = memref.load %arg2[%c0_1] : memref<1xf32, #tpu.memory_space<smem>>
    %c0_2 = arith.constant 0 : index
    %c0_3 = arith.constant 0 : index
    %c0_4 = arith.constant 0 : index
    %2 = vector.load %arg0[%c0_2, %c0_3, %c0_4] : memref<2x12x256xf32, #tpu.memory_space<vmem>>, vector<1x12x256xf32>
    %3 = vector.shape_cast %2 : vector<1x12x256xf32> to vector<12x256xf32>
    %4 = vector.broadcast %0 : vector<12x1xf32> to vector<12x256xf32>
    %5 = arith.mulf %3, %4 : vector<12x256xf32>
    %cst = arith.constant dense<0.000000e+00> : vector<256xf32>
    %6 = vector.multi_reduction <add>, %5, %cst [0] : vector<12x256xf32> to vector<256xf32>
    %7 = vector.shape_cast %6 : vector<256xf32> to vector<1x256xf32>
    %c1 = arith.constant 1 : index
    %c0_5 = arith.constant 0 : index
    %c0_6 = arith.constant 0 : index
    %8 = vector.load %arg0[%c1, %c0_5, %c0_6] : memref<2x12x256xf32, #tpu.memory_space<vmem>>, vector<1x12x256xf32>
    %9 = vector.shape_cast %8 : vector<1x12x256xf32> to vector<12x256xf32>
    %10 = vector.broadcast %0 : vector<12x1xf32> to vector<12x256xf32>
    %11 = arith.mulf %9, %10 : vector<12x256xf32>
    %cst_7 = arith.constant dense<0.000000e+00> : vector<256xf32>
    %12 = vector.multi_reduction <add>, %11, %cst_7 [0] : vector<12x256xf32> to vector<256xf32>
    %13 = vector.shape_cast %12 : vector<256xf32> to vector<1x256xf32>
    %14 = tpu.concatenate %7, %13 in 0 : vector<1x256xf32>, vector<1x256xf32> -> vector<2x256xf32>
    %15 = vector.broadcast %1 : f32 to vector<2x256xf32>
    %16 = arith.addf %14, %15 : vector<2x256xf32>
    %c0_8 = arith.constant 0 : index
    %c0_9 = arith.constant 0 : index
    %17 = vector.load %arg3[%c0_8, %c0_9] : memref<2x256xf32, #tpu.memory_space<vmem>>, vector<2x256xf32>
    tpu.vector_store %arg3[%c0_8, %c0_9], %16 {strides = array<i32>} : memref<2x256xf32, #tpu.memory_space<vmem>>, vector<2x256xf32>,
    return
  }
}

</mosaic_0001>

<llo_original>
// kernel: tpu_custom_call.1
$region0: #{tpu_custom_call.1}
  #allocation0 [shape = 'u32[]', space=smem, size = 0x4, offset = 0x4, fixed_abs, tag = 'smem constant byte address 0x4 - core index']
  #allocation1 [shape = 'u32[144,128]{1,0:T(1,128)}', space=vmem, size = 0x12000, scoped, tag = 'internal scratch']
  #allocation2 [shape = 'f32[1]{0:T(128)S(6)}', space=smem, size = 0x200, scoped, tag = 'scoped memory for tpu_custom_call.1']
  %s0 = inlined_call_operand.vmem [shape: f32[2,12,256], index: 0, kind: input, shape index: {}]
  %s1 = inlined_call_operand.vmem [shape: f32[12,1], index: 1, kind: input, shape index: {}]
  %s2 = inlined_call_operand.<no memory space> [shape: f32[1], index: 2, kind: input, shape index: {}]
  %s3 = inlined_call_operand.hbm [shape: f32[2,256], index: 3, kind: output, shape index: {}]
  %s4 = sld [smem:[#allocation0]]
  $region22: #{tpu_custom_call.1} parent=0
    _
  %s6 = ssub.s32 1, %s4
  %s7 = scalar_select 0, %s6, %s4
  %8 = sst [smem:[#allocation2]] %s2
  $region1: #{tpu_custom_call.1} parent=0
    #allocation3 [shape = 'u8[2048]{0}', space=vmem, size = 0x800, scoped, tag = 'output window, operand 0, single buffered']
    #allocation4 [shape = 's32[1]{0}', space=sflag, size = 0x4, scoped, tag = 'scoped memory for tpu_custom_call.1']
    %9 = vsyncpa [#allocation4], 0
    // Predicated region
    $region2: #{tpu_custom_call.1} parent=1 // pred_check
      _
    $region3: #{tpu_custom_call.1} parent=1 // pred_check_branch
      %11 = sbr.rel (0) target = $region5
    $region4: #{tpu_custom_call.1} parent=1 // pred_region
      _
    $region5: #{tpu_custom_call.1} parent=1 // pred_fallthru
      _
    // Predicated region
    $region6: #{tpu_custom_call.1} parent=1 // pred_check
      _
    $region7: #{tpu_custom_call.1} parent=1 // pred_check_branch
      %13 = sbr.rel (0) target = $region9
    $region8: #{tpu_custom_call.1} parent=1 // pred_region
      _
    $region9: #{tpu_custom_call.1} parent=1 // pred_fallthru
      _
    // Predicated region
    $region10: #{tpu_custom_call.1} parent=1 // pred_check
      _
    $region11: #{tpu_custom_call.1} parent=1 // pred_check_branch
      %15 = sbr.rel (0) target = $region13
    $region12: #{tpu_custom_call.1} parent=1 // pred_region
      _
    $region13: #{tpu_custom_call.1} parent=1 // pred_fallthru
      _
    %v16 = vld [vmem:[%s1] sm:$0xff]
    %v17 = vld [vmem:[%s1 + $0x8] sm:$0xf]
    %s18 = sld [smem:[#allocation2]]
    %v19 = vld [vmem:[%s0] sm:$0xff]
    %v20 = vld [vmem:[%s0 + $0x8] sm:$0xff]
    %v21 = vld [vmem:[%s0 + $0x10] sm:$0xf]
    %v22 = vld [vmem:[%s0 + $0x18] sm:$0xf]
    %24 = vset.pattern.permute.xlu0 0
    %25 = vperm.xlu0 %24, %v16
    %v26 = vpop.permute.xlu0 %25
    %29 = vset.pattern.permute.xlu0 0
    %30 = vperm.xlu0 %29, %v17
    %v31 = vpop.permute.xlu0 %30
    %v33 = vmul.f32 %v19, %v26
    %v34 = vmul.f32 %v20, %v26
    %v35 = vmul.f32 %v21, %v31
    %v36 = vmul.f32 %v22, %v31
    %vm37 = vcmask 1043456
    %v38 = vsel %vm37, %v35, 0.0
    %v39 = vadd.f32 %v33, %v38
    %v40 = vrot.slane %v39, 4
    %v41 = vadd.f32 %v39, %v40
    %v42 = vrot.slane %v41, 2
    %v43 = vadd.f32 %v41, %v42
    %v44 = vrot.slane %v43, 1
    %v45 = vadd.f32 %v43, %v44
    %v46 = vsel %vm37, %v36, 0.0
    %v47 = vadd.f32 %v34, %v46
    %v48 = vrot.slane %v47, 4
    %v49 = vadd.f32 %v47, %v48
    %v50 = vrot.slane %v49, 2
    %v51 = vadd.f32 %v49, %v50
    %v52 = vrot.slane %v51, 1
    %v53 = vadd.f32 %v51, %v52
    %s54 = scalar_lea.vmem %s0, 32
    %v55 = vld [vmem:[%s54] sm:$0xff]
    %v56 = vld [vmem:[%s54 + $0x8] sm:$0xff]
    %v57 = vld [vmem:[%s54 + $0x10] sm:$0xf]
    %v58 = vld [vmem:[%s54 + $0x18] sm:$0xf]
    %v59 = vmul.f32 %v55, %v26
    %v60 = vmul.f32 %v56, %v26
    %v61 = vmul.f32 %v57, %v31
    %v62 = vmul.f32 %v58, %v31
    %v63 = vsel %vm37, %v61, 0.0
    %v64 = vadd.f32 %v59, %v63
    %v65 = vrot.slane %v64, 4
    %v66 = vadd.f32 %v64, %v65
    %v67 = vrot.slane %v66, 2
    %v68 = vadd.f32 %v66, %v67
    %v69 = vrot.slane %v68, 1
    %v70 = vadd.f32 %v68, %v69
    %v71 = vsel %vm37, %v62, 0.0
    %v72 = vadd.f32 %v60, %v71
    %v73 = vrot.slane %v72, 4
    %v74 = vadd.f32 %v72, %v73
    %v75 = vrot.slane %v74, 2
    %v76 = vadd.f32 %v74, %v75
    %v77 = vrot.slane %v76, 1
    %v78 = vadd.f32 %v76, %v77
    %vm79 = vcmask 1040384
    %v80 = vsel %vm79, %v45, %v70
    %v81 = vsel %vm79, %v53, %v78
    %v82 = vstv %s18
    %v83 = vadd.f32 %v80, %v82
    %v84 = vadd.f32 %v81, %v82
    %v87 = vcombine.low %v83, %v84
    %v89 = vunpack.c.l.s4 1983009808
    %v90 = vunpack.c.0.s8 %v89
    %v91 = vlaneseq
    %v92 = vshrl.u32 %v91, 7
    %v93 = vsub.s32 %v90, %v92
    %v94 = vrot.slane %v87, %v93
    %96 = vst [vmem:[#allocation3] sm:$0xf] %v94
    // Predicated region
    $region14: #{tpu_custom_call.1} parent=1 // pred_check
      _
    $region15: #{tpu_custom_call.1} parent=1 // pred_check_branch
      %98 = sbr.rel (0) target = $region17
    $region16: #{tpu_custom_call.1} parent=1 // pred_region
      %s100 = ssub.s32 64, 64
      %101 = vsyncadd [#allocation4], %s100
      %s103 = sshll.u32 [#allocation3], 4
      %s104 = int_to_ptr.vmem [resolvable:$true] %s103
      %106 = dma.vmem_to_hbm [thread:$0]  %s104, 64, %s3, [#allocation4]
    $region17: #{tpu_custom_call.1} parent=1 // pred_fallthru
      _
    // Predicated region
    $region18: #{tpu_custom_call.1} parent=1 // pred_check
      _
    $region19: #{tpu_custom_call.1} parent=1 // pred_check_branch
      %108 = sbr.rel (0) target = $region21
    $region20: #{tpu_custom_call.1} parent=1 // pred_region
      %109 = dma.done [#allocation4], 64
    $region21: #{tpu_custom_call.1} parent=1 // pred_fallthru
      _
    %110 = vsyncpa [#allocation4], 1

</llo_original>
